<compile_context>
chip_gen: v6e
topology: v6e:2x2x1
jax: 0.10.0
libtpu: 0.0.40
codegen_flags: <defaults>
</compile_context>

<pallas_src>
import functools
import math
from typing import NamedTuple

import jax
import jax.numpy as jnp
from jax import lax
from jax.experimental import pallas as pl
from jax.experimental.pallas import tpu as pltpu


def _round_up(x, m):
    return (x + m - 1) // m * m


def _chip_kind():
    try:
        return jax.devices()[0].device_kind.lower()
    except Exception:
        return ""


def _feat_align():
    kind = _chip_kind()
    # v6e / v7x MXUs are 2x256x256: 256-aligned tiles avoid partially filled passes.
    if "v6" in kind or "v7" in kind:
        return 256
    return 128


def _vmem_capacity_bytes():
    try:
        return int(pltpu.get_tpu_info().vmem_capacity_bytes)
    except Exception:
        kind = _chip_kind()
        return (64 << 20) if "v7" in kind else (128 << 20)


def _const_spec(shape, index_map):
    """BlockSpec for a block whose index never changes: single-buffer it."""
    try:
        return pl.BlockSpec(shape, index_map, pipeline_mode=pl.Buffered(1))
    except TypeError:
        # older jax without pipeline_mode: fall back to the default spec
        return pl.BlockSpec(shape, index_map)


# --------------------------------------------------------------------------- #
# Kernel
# --------------------------------------------------------------------------- #
def _ff_kernel(x_ref, g_ref, b_ref, w1_ref, b1_ref, w2_ref, b2_ref, o_ref,
               xn_ref, acc_ref, *, dim_true):
    k = pl.program_id(1)

    # ---- per row-tile prologue: LayerNorm once, zero the accumulator ----
    @pl.when(k == 0)
    def _():
        x = x_ref[...].astype(jnp.float32)                     # (tm, dim_p)
        inv_d = 1.0 / dim_true
        mu = jnp.sum(x, axis=-1, keepdims=True) * inv_d        # padded lanes are 0
        meansq = jnp.sum(x * x, axis=-1, keepdims=True) * inv_d
        var = jnp.maximum(meansq - mu * mu, 0.0)
        xn = (x - mu) * lax.rsqrt(var + 1e-5)
        xn_ref[...] = (xn * g_ref[...] + b_ref[...]).astype(xn_ref.dtype)
        acc_ref[...] = jnp.zeros_like(acc_ref)

    # ---- hidden chunk: Linear(dim -> hk) on the MXU, f32 accumulate ----
    h = jnp.dot(xn_ref[...], w1_ref[...], preferred_element_type=jnp.float32)
    h = h + b1_ref[...]

    # exact (erf-based) GELU on the (tm, hk) chunk, matching torch.nn.GELU()
    h = 0.5 * h * (1.0 + lax.erf(h * (1.0 / math.sqrt(2.0))))

    # ---- Linear(hk -> dim): accumulate into the resident f32 output tile ----
    acc_ref[...] += jnp.dot(h.astype(w2_ref.dtype), w2_ref[...],
                            preferred_element_type=jnp.float32)

    # ---- epilogue: add output bias and store ----
    @pl.when(k == pl.num_programs(1) - 1)
    def _():
        o_ref[...] = (acc_ref[...] + b2_ref[...]).astype(o_ref.dtype)


# --------------------------------------------------------------------------- #
# Parameter preparation (one-time; hoisted out of the hot path)
# --------------------------------------------------------------------------- #
class FFParams(NamedTuple):
    gamma: jax.Array   # (1, dim_p)  f32
    beta: jax.Array    # (1, dim_p)  f32
    w1: jax.Array      # (dim_p, hid_p)  matmul dtype
    b1: jax.Array      # (1, hid_p)  f32
    w2: jax.Array      # (hid_p, dim_p)  matmul dtype
    b2: jax.Array      # (1, dim_p)  f32
    dim: int
    hidden: int
    dim_p: int
    hid_p: int
    hk: int


def prepare_params(gamma, beta, w1, b1, w2, b2, *,
                   use_bf16_matmul=True, hidden_tile=512, feat_align=None):
    """Pad/cast parameters once so the kernel is the only per-call weight traffic."""
    dim, hidden = w1.shape
    if feat_align is None:
        feat_align = _feat_align()

    dim_p = _round_up(dim, feat_align)
    hid_p = _round_up(hidden, feat_align)
    hk = min(hid_p, _round_up(hidden_tile, feat_align))   # streamed hidden chunk
    hid_p = _round_up(hid_p, hk)                          # grid needs hid_p % hk == 0

    pd, ph = dim_p - dim, hid_p - hidden
    f32 = jnp.float32
    wdt = jnp.bfloat16 if use_bf16_matmul else w1.dtype

    g2 = jnp.pad(gamma.astype(f32), (0, pd)).reshape(1, dim_p)
    be2 = jnp.pad(beta.astype(f32), (0, pd)).reshape(1, dim_p)
    b1_2 = jnp.pad(b1.astype(f32), (0, ph)).reshape(1, hid_p)
    b2_2 = jnp.pad(b2.astype(f32), (0, pd)).reshape(1, dim_p)
    w1p = jnp.pad(w1, ((0, pd), (0, ph))).astype(wdt)
    w2p = jnp.pad(w2, ((0, ph), (0, pd))).astype(wdt)

    return FFParams(g2, be2, w1p, b1_2, w2p, b2_2, dim, hidden, dim_p, hid_p, hk)


# --------------------------------------------------------------------------- #
# Wrapper
# --------------------------------------------------------------------------- #
def feed_forward(x, p: FFParams, *, tile_rows=256, out_dtype=None):
    """x: (B, N, dim). Parameters come from prepare_params()."""
    B, N, dim = x.shape
    assert dim == p.dim, (dim, p.dim)
    M = B * N
    dim_p, hid_p, hk = p.dim_p, p.hid_p, p.hk
    out_dtype = x.dtype if out_dtype is None else out_dtype
    mat_dtype = p.w1.dtype

    # ---- row tiling: big tiles, but keep >= 2 row steps so the "parallel" axis
    #      can actually shard across v7x's two TensorCores ----
    tm = _round_up(min(tile_rows, _round_up(M, 8)), 8)
    if _round_up(M, tm) // tm < 2:
        tm_half = _round_up(max(tm // 2, 8), 8)
        if _round_up(M, tm_half) // tm_half >= 2:
            tm = tm_half
    M_p = _round_up(M, tm)

    # ---- activations: skip the pad copy when already aligned ----
    x2 = x.reshape(M, dim)
    if (M_p != M) or (dim_p != dim):
        x2 = jnp.pad(x2, ((0, M_p - M), (0, dim_p - dim)))

    grid = (M_p // tm, hid_p // hk)   # reduction (hidden) axis last, "arbitrary"

    xbytes = jnp.dtype(x.dtype).itemsize
    wbytes = jnp.dtype(mat_dtype).itemsize
    obytes = jnp.dtype(out_dtype).itemsize

    # ---- explicit VMEM budget, capped per chip generation ----
    vmem_bytes = (
        2 * tm * dim_p * xbytes              # x tile (double-buffered)
        + 2 * tm * dim_p * obytes            # out tile (double-buffered)
        + 2 * dim_p * hk * wbytes            # streamed w1 chunk (double-buffered)
        + 2 * hk * dim_p * wbytes            # streamed w2 chunk (double-buffered)
        + 2 * hk * 4                         # b1 chunk
        + 3 * dim_p * 4                      # gamma / beta / b2 (single-buffered)
        + tm * dim_p * wbytes                # LayerNorm-output scratch
        + tm * dim_p * 4                     # f32 accumulator scratch
        + 2 * tm * hk * 4                    # live f32 hidden chunk + temporaries
    )
    cap = _vmem_capacity_bytes() - (8 << 20)   # headroom for compiler scratch/spills
    vmem_limit = int(min(max(vmem_bytes * 3 // 2 + (4 << 20), 16 << 20), cap))

    cost = pl.CostEstimate(
        flops=4 * M_p * dim_p * hid_p,         # two matmuls
        transcendentals=M_p * hid_p,           # erf in GELU
        bytes_accessed=(
            M_p * dim_p * xbytes                                   # x in
            + M_p * dim_p * obytes                                 # out
            + (M_p // tm) * 2 * dim_p * hid_p * wbytes             # w1 + w2 per row tile
            + 3 * dim_p * 4 + hid_p * 4                            # gamma/beta/b2 + b1
        ),
    )

    kernel = functools.partial(_ff_kernel, dim_true=dim)

    out = pl.pallas_call(
        kernel,
        out_shape=jax.ShapeDtypeStruct((M_p, dim_p), out_dtype),
        grid_spec=pltpu.PrefetchScalarGridSpec(
            num_scalar_prefetch=0,
            grid=grid,
            in_specs=[
                pl.BlockSpec((tm, dim_p), lambda i, k: (i, 0)),      # x rows
                _const_spec((1, dim_p), lambda i, k: (0, 0)),        # ln gamma
                _const_spec((1, dim_p), lambda i, k: (0, 0)),        # ln beta
                pl.BlockSpec((dim_p, hk), lambda i, k: (0, k)),      # w1 chunk (streamed)
                pl.BlockSpec((1, hk), lambda i, k: (0, k)),          # b1 chunk
                pl.BlockSpec((hk, dim_p), lambda i, k: (k, 0)),      # w2 chunk (streamed)
                _const_spec((1, dim_p), lambda i, k: (0, 0)),        # b2
            ],
            out_specs=pl.BlockSpec((tm, dim_p), lambda i, k: (i, 0)),
            scratch_shapes=[
                pltpu.VMEM((tm, dim_p), mat_dtype),    # LayerNorm output (reused over k)
                pltpu.VMEM((tm, dim_p), jnp.float32),  # f32 output accumulator
            ],
        ),
        compiler_params=pltpu.CompilerParams(
            dimension_semantics=("parallel", "arbitrary"),
            vmem_limit_bytes=vmem_limit,
        ),
        cost_estimate=cost,
    )(x2, p.gamma, p.beta, p.w1, p.b1, p.w2, p.b2)

    return out[:M, :dim].reshape(B, N, dim)


# --------------------------------------------------------------------------- #
# Self-test
# --------------------------------------------------------------------------- #
if __name__ == "__main__":
    # small shapes consistent with the module: tokens of width `dim`
    B, N, dim, hidden = 2, 8, 32, 64

    key = jax.random.PRNGKey(0)
    kx, kw1, kb1, kw2, kb2 = jax.random.split(key, 5)

    x = jax.random.normal(kx, (B, N, dim), dtype=jnp.float32)

    # parameter shapes from nn.LayerNorm(dim), nn.Linear(dim, hidden), nn.Linear(hidden, dim)
    gamma = jnp.ones((dim,), dtype=jnp.float32)
    beta = jnp.zeros((dim,), dtype=jnp.float32)
    lim1 = 1.0 / math.sqrt(dim)
    w1 = jax.random.uniform(kw1, (dim, hidden), minval=-lim1, maxval=lim1, dtype=jnp.float32)
    b1 = jax.random.uniform(kb1, (hidden,), minval=-lim1, maxval=lim1, dtype=jnp.float32)
    lim2 = 1.0 / math.sqrt(hidden)
    w2 = jax.random.uniform(kw2, (hidden, dim), minval=-lim2, maxval=lim2, dtype=jnp.float32)
    b2 = jax.random.uniform(kb2, (dim,), minval=-lim2, maxval=lim2, dtype=jnp.float32)

    # pure-JAX reference (matches the PyTorch module exactly: erf GELU, eps=1e-5)
    def ref(x):
        mu = jnp.mean(x, axis=-1, keepdims=True)
        var = jnp.mean((x - mu) ** 2, axis=-1, keepdims=True)
        xn = (x - mu) / jnp.sqrt(var + 1e-5) * gamma + beta
        h = xn @ w1 + b1
        h = 0.5 * h * (1.0 + lax.erf(h / math.sqrt(2.0)))
        return h @ w2 + b2

    y_ref = ref(x)

    # fast path: bf16 MXU operands, f32 accumulation -> relaxed tolerance
    p_bf16 = prepare_params(gamma, beta, w1, b1, w2, b2, use_bf16_matmul=True)
    y_fast = jax.block_until_ready(feed_forward(x, p_bf16))
    assert jnp.allclose(y_fast, y_ref, atol=3e-2, rtol=3e-2), \
        float(jnp.max(jnp.abs(y_fast - y_ref)))

    # exact path: f32 matmuls reproduce the module to tight tolerance
    p_f32 = prepare_params(gamma, beta, w1, b1, w2, b2, use_bf16_matmul=False)
    y_f32 = jax.block_until_ready(feed_forward(x, p_f32))
    assert jnp.allclose(y_f32, y_ref, atol=5e-5, rtol=5e-5), \
        float(jnp.max(jnp.abs(y_f32 - y_ref)))

    print("KERNEL_OK")
</pallas_src>

<mosaic_0001>
module attributes {stable_mosaic.version = 11 : i64} {
  func.func @_ff_kernel(%arg0: i32, %arg1: i32, %arg2: memref<8x128xf32, #tpu.memory_space<vmem>>, %arg3: memref<1x128xf32, #tpu.memory_space<vmem>>, %arg4: memref<1x128xf32, #tpu.memory_space<vmem>>, %arg5: memref<128x128xbf16, #tpu.memory_space<vmem>>, %arg6: memref<1x128xf32, #tpu.memory_space<vmem>>, %arg7: memref<128x128xbf16, #tpu.memory_space<vmem>>, %arg8: memref<1x128xf32, #tpu.memory_space<vmem>>, %arg9: memref<8x128xf32, #tpu.memory_space<vmem>>, %arg10: memref<8x128xbf16, #tpu.memory_space<vmem>>, %arg11: memref<8x128xf32, #tpu.memory_space<vmem>>) attributes {dimension_semantics = [#tpu.dimension_semantics<parallel>, #tpu.dimension_semantics<arbitrary>], iteration_bounds = array<i64: 2, 1>, scalar_prefetch = 0 : i64, scratch_operands = 2 : i64, tpu.core_type = #tpu.core_type<tc>, window_params = [{transform_indices = @transform_0, window_bounds = array<i64: 8, 128>}, {pipeline_mode = #tpu.pipeline_mode<synchronous>, transform_indices = @transform_1, window_bounds = array<i64: 1, 128>}, {pipeline_mode = #tpu.pipeline_mode<synchronous>, transform_indices = @transform_2, window_bounds = array<i64: 1, 128>}, {transform_indices = @transform_3, window_bounds = array<i64: 128, 128>}, {transform_indices = @transform_4, window_bounds = array<i64: 1, 128>}, {transform_indices = @transform_5, window_bounds = array<i64: 128, 128>}, {pipeline_mode = #tpu.pipeline_mode<synchronous>, transform_indices = @transform_6, window_bounds = array<i64: 1, 128>}, {transform_indices = @transform_7, window_bounds = array<i64: 8, 128>}]} {
    %c0_i32 = arith.constant 0 : i32
    %0 = arith.cmpi eq, %arg1, %c0_i32 : i32
    %1 = arith.extui %0 : i1 to i32
    %c0_i32_0 = arith.constant 0 : i32
    %2 = arith.cmpi ne, %1, %c0_i32_0 : i32
    scf.if %2 {
      %c0_18 = arith.constant 0 : index
      %c0_19 = arith.constant 0 : index
      %26 = vector.load %arg2[%c0_18, %c0_19] : memref<8x128xf32, #tpu.memory_space<vmem>>, vector<8x128xf32>
      %cst_20 = arith.constant dense<0.000000e+00> : vector<8xf32>
      %27 = vector.multi_reduction <add>, %26, %cst_20 [1] : vector<8x128xf32> to vector<8xf32>
      %28 = vector.shape_cast %27 : vector<8xf32> to vector<8x1xf32>
      %cst_21 = arith.constant 3.125000e-02 : f32
      %29 = vector.broadcast %cst_21 : f32 to vector<8x1xf32>
      %30 = arith.mulf %28, %29 : vector<8x1xf32>
      %31 = arith.mulf %26, %26 : vector<8x128xf32>
      %cst_22 = arith.constant dense<0.000000e+00> : vector<8xf32>
      %32 = vector.multi_reduction <add>, %31, %cst_22 [1] : vector<8x128xf32> to vector<8xf32>
      %33 = vector.shape_cast %32 : vector<8xf32> to vector<8x1xf32>
      %cst_23 = arith.constant 3.125000e-02 : f32
      %34 = vector.broadcast %cst_23 : f32 to vector<8x1xf32>
      %35 = arith.mulf %33, %34 : vector<8x1xf32>
      %36 = arith.mulf %30, %30 : vector<8x1xf32>
      %37 = arith.subf %35, %36 : vector<8x1xf32>
      %cst_24 = arith.constant 0.000000e+00 : f32
      %38 = vector.broadcast %cst_24 : f32 to vector<8x1xf32>
      %39 = arith.maximumf %37, %38 : vector<8x1xf32>
      %40 = vector.broadcast %30 : vector<8x1xf32> to vector<8x128xf32>
      %41 = arith.subf %26, %40 : vector<8x128xf32>
      %cst_25 = arith.constant 9.99999974E-6 : f32
      %42 = vector.broadcast %cst_25 : f32 to vector<8x1xf32>
      %43 = arith.addf %39, %42 : vector<8x1xf32>
      %44 = math.rsqrt %43 : vector<8x1xf32>
      %45 = vector.broadcast %44 : vector<8x1xf32> to vector<8x128xf32>
      %46 = arith.mulf %41, %45 : vector<8x128xf32>
      %c0_26 = arith.constant 0 : index
      %c0_27 = arith.constant 0 : index
      %47 = vector.load %arg3[%c0_26, %c0_27] : memref<1x128xf32, #tpu.memory_space<vmem>>, vector<1x128xf32>
      %48 = vector.broadcast %47 : vector<1x128xf32> to vector<8x128xf32>
      %49 = arith.mulf %46, %48 : vector<8x128xf32>
      %c0_28 = arith.constant 0 : index
      %c0_29 = arith.constant 0 : index
      %50 = vector.load %arg4[%c0_28, %c0_29] : memref<1x128xf32, #tpu.memory_space<vmem>>, vector<1x128xf32>
      %51 = vector.broadcast %50 : vector<1x128xf32> to vector<8x128xf32>
      %52 = arith.addf %49, %51 : vector<8x128xf32>
      %53 = arith.truncf %52 : vector<8x128xf32> to vector<8x128xbf16>
      %c0_30 = arith.constant 0 : index
      %c0_31 = arith.constant 0 : index
      %54 = vector.load %arg10[%c0_30, %c0_31] : memref<8x128xbf16, #tpu.memory_space<vmem>>, vector<8x128xbf16>
      tpu.vector_store %arg10[%c0_30, %c0_31], %53 {strides = array<i32>} : memref<8x128xbf16, #tpu.memory_space<vmem>>, vector<8x128xbf16>,
      %cst_32 = arith.constant 0.000000e+00 : f32
      %55 = vector.broadcast %cst_32 : f32 to vector<8x128xf32>
      %c0_33 = arith.constant 0 : index
      %c0_34 = arith.constant 0 : index
      %56 = vector.load %arg11[%c0_33, %c0_34] : memref<8x128xf32, #tpu.memory_space<vmem>>, vector<8x128xf32>
      tpu.vector_store %arg11[%c0_33, %c0_34], %55 {strides = array<i32>} : memref<8x128xf32, #tpu.memory_space<vmem>>, vector<8x128xf32>,
    } else {
    }
    %c0 = arith.constant 0 : index
    %c0_1 = arith.constant 0 : index
    %3 = vector.load %arg10[%c0, %c0_1] : memref<8x128xbf16, #tpu.memory_space<vmem>>, vector<8x128xbf16>
    %c0_2 = arith.constant 0 : index
    %c0_3 = arith.constant 0 : index
    %4 = vector.load %arg5[%c0_2, %c0_3] : memref<128x128xbf16, #tpu.memory_space<vmem>>, vector<128x128xbf16>
    %cst = arith.constant dense<0.000000e+00> : vector<8x128xf32>
    %5 = tpu.matmul %3, %4, %cst {dimension_numbers = #tpu.dot_dimension_numbers<[1], [0], [0], [1], [0, 0, 1, 1], [], []>} : vector<8x128xbf16>, vector<128x128xbf16>, vector<8x128xf32> -> vector<8x128xf32>
    %c0_4 = arith.constant 0 : index
    %c0_5 = arith.constant 0 : index
    %6 = vector.load %arg6[%c0_4, %c0_5] : memref<1x128xf32, #tpu.memory_space<vmem>>, vector<1x128xf32>
    %7 = vector.broadcast %6 : vector<1x128xf32> to vector<8x128xf32>
    %8 = arith.addf %5, %7 : vector<8x128xf32>
    %cst_6 = arith.constant 5.000000e-01 : f32
    %9 = vector.broadcast %cst_6 : f32 to vector<8x128xf32>
    %10 = arith.mulf %9, %8 : vector<8x128xf32>
    %cst_7 = arith.constant 0.707106769 : f32
    %11 = vector.broadcast %cst_7 : f32 to vector<8x128xf32>
    %12 = arith.mulf %8, %11 : vector<8x128xf32>
    %13 = math.erf %12 : vector<8x128xf32>
    %cst_8 = arith.constant 1.000000e+00 : f32
    %14 = vector.broadcast %cst_8 : f32 to vector<8x128xf32>
    %15 = arith.addf %14, %13 : vector<8x128xf32>
    %16 = arith.mulf %10, %15 : vector<8x128xf32>
    %c0_9 = arith.constant 0 : index
    %c0_10 = arith.constant 0 : index
    %17 = vector.load %arg11[%c0_9, %c0_10] : memref<8x128xf32, #tpu.memory_space<vmem>>, vector<8x128xf32>
    %18 = arith.truncf %16 : vector<8x128xf32> to vector<8x128xbf16>
    %c0_11 = arith.constant 0 : index
    %c0_12 = arith.constant 0 : index
    %19 = vector.load %arg7[%c0_11, %c0_12] : memref<128x128xbf16, #tpu.memory_space<vmem>>, vector<128x128xbf16>
    %cst_13 = arith.constant dense<0.000000e+00> : vector<8x128xf32>
    %20 = tpu.matmul %18, %19, %cst_13 {dimension_numbers = #tpu.dot_dimension_numbers<[1], [0], [0], [1], [0, 0, 1, 1], [], []>} : vector<8x128xbf16>, vector<128x128xbf16>, vector<8x128xf32> -> vector<8x128xf32>
    %21 = arith.addf %17, %20 : vector<8x128xf32>
    %c0_14 = arith.constant 0 : index
    %c0_15 = arith.constant 0 : index
    %22 = vector.load %arg11[%c0_14, %c0_15] : memref<8x128xf32, #tpu.memory_space<vmem>>, vector<8x128xf32>
    tpu.vector_store %arg11[%c0_14, %c0_15], %21 {strides = array<i32>} : memref<8x128xf32, #tpu.memory_space<vmem>>, vector<8x128xf32>,
    %c0_i32_16 = arith.constant 0 : i32
    %23 = arith.cmpi eq, %arg1, %c0_i32_16 : i32
    %24 = arith.extui %23 : i1 to i32
    %c0_i32_17 = arith.constant 0 : i32
    %25 = arith.cmpi ne, %24, %c0_i32_17 : i32
    scf.if %25 {
      %c0_18 = arith.constant 0 : index
      %c0_19 = arith.constant 0 : index
      %26 = vector.load %arg11[%c0_18, %c0_19] : memref<8x128xf32, #tpu.memory_space<vmem>>, vector<8x128xf32>
      %c0_20 = arith.constant 0 : index
      %c0_21 = arith.constant 0 : index
      %27 = vector.load %arg8[%c0_20, %c0_21] : memref<1x128xf32, #tpu.memory_space<vmem>>, vector<1x128xf32>
      %28 = vector.broadcast %27 : vector<1x128xf32> to vector<8x128xf32>
      %29 = arith.addf %26, %28 : vector<8x128xf32>
      %c0_22 = arith.constant 0 : index
      %c0_23 = arith.constant 0 : index
      %30 = vector.load %arg9[%c0_22, %c0_23] : memref<8x128xf32, #tpu.memory_space<vmem>>, vector<8x128xf32>
      tpu.vector_store %arg9[%c0_22, %c0_23], %29 {strides = array<i32>} : memref<8x128xf32, #tpu.memory_space<vmem>>, vector<8x128xf32>,
    } else {
    }
    return
  }
  func.func @transform_0(%arg0: i32, %arg1: i32) -> (i32, i32) {
    %c0_i32 = arith.constant 0 : i32
    %c0_i32_0 = arith.constant 0 : i32
    return %arg0, %c0_i32 : i32, i32
  }
  func.func @transform_1(%arg0: i32, %arg1: i32) -> (i32, i32) {
    %c0_i32 = arith.constant 0 : i32
    %c0_i32_0 = arith.constant 0 : i32
    %c0_i32_1 = arith.constant 0 : i32
    return %c0_i32, %c0_i32_0 : i32, i32
  }
  func.func @transform_2(%arg0: i32, %arg1: i32) -> (i32, i32) {
    %c0_i32 = arith.constant 0 : i32
    %c0_i32_0 = arith.constant 0 : i32
    %c0_i32_1 = arith.constant 0 : i32
    return %c0_i32, %c0_i32_0 : i32, i32
  }
  func.func @transform_3(%arg0: i32, %arg1: i32) -> (i32, i32) {
    %c0_i32 = arith.constant 0 : i32
    %c0_i32_0 = arith.constant 0 : i32
    return %c0_i32, %arg1 : i32, i32
  }
  func.func @transform_4(%arg0: i32, %arg1: i32) -> (i32, i32) {
    %c0_i32 = arith.constant 0 : i32
    %c0_i32_0 = arith.constant 0 : i32
    return %c0_i32, %arg1 : i32, i32
  }
  func.func @transform_5(%arg0: i32, %arg1: i32) -> (i32, i32) {
    %c0_i32 = arith.constant 0 : i32
    %c0_i32_0 = arith.constant 0 : i32
    return %arg1, %c0_i32 : i32, i32
  }
  func.func @transform_6(%arg0: i32, %arg1: i32) -> (i32, i32) {
    %c0_i32 = arith.constant 0 : i32
    %c0_i32_0 = arith.constant 0 : i32
    %c0_i32_1 = arith.constant 0 : i32
    return %c0_i32, %c0_i32_0 : i32, i32
  }
  func.func @transform_7(%arg0: i32, %arg1: i32) -> (i32, i32) {
    %c0_i32 = arith.constant 0 : i32
    %c0_i32_0 = arith.constant 0 : i32
    return %arg0, %c0_i32 : i32, i32
  }
}

</mosaic_0001>

<llo_original>
// kernel: tpu_custom_call.1
$region0: #{tpu_custom_call.1}
  #allocation0 [shape = 'u32[]', space=smem, size = 0x4, offset = 0x4, fixed_abs, tag = 'smem constant byte address 0x4 - core index']
  #allocation1 [shape = 'u32[144,128]{1,0:T(1,128)}', space=vmem, size = 0x12000, scoped, tag = 'internal scratch']
  #allocation2 [shape = 'bf16[8,128]{1,0:T(8,128)(2,1)}', space=vmem, size = 0x800, scoped, tag = 'scratch operand']
  #allocation3 [shape = 'f32[8,128]{1,0:T(8,128)}', space=vmem, size = 0x1000, scoped, tag = 'scratch operand']
  %s0 = inlined_call_operand.hbm [shape: f32[16,128], index: 0, kind: input, shape index: {}]
  %s1 = inlined_call_operand.vmem [shape: f32[1,128], index: 1, kind: input, shape index: {}]
  %s2 = inlined_call_operand.vmem [shape: f32[1,128], index: 2, kind: input, shape index: {}]
  %s3 = inlined_call_operand.hbm [shape: bf16[128,128], index: 3, kind: input, shape index: {}]
  %s4 = inlined_call_operand.vmem [shape: f32[1,128], index: 4, kind: input, shape index: {}]
  %s5 = inlined_call_operand.hbm [shape: bf16[128,128], index: 5, kind: input, shape index: {}]
  %s6 = inlined_call_operand.vmem [shape: f32[1,128], index: 6, kind: input, shape index: {}]
  %s7 = inlined_call_operand.hbm [shape: f32[16,128], index: 7, kind: output, shape index: {}]
  %s8 = sld [smem:[#allocation0]]
  $region81: #{tpu_custom_call.1} parent=0
    _
  %s10 = ssub.s32 1, %s8
  %s11 = scalar_select 0, %s10, %s8
  $region1: #{tpu_custom_call.1} parent=0
    #allocation4 [shape = 'u8[8192]{0}', space=vmem, size = 0x2000, scoped, tag = 'input window, operand 0']
    #allocation5 [shape = 's32[2]{0}', space=sflag, size = 0x8, scoped, tag = 'scoped memory for tpu_custom_call.1']
    #allocation6 [shape = 's32[2]{0}', space=sflag, size = 0x8, scoped, tag = 'scoped memory for tpu_custom_call.1']
    #allocation7 [shape = 'u8[32768]{0}', space=vmem, size = 0x8000, scoped, tag = 'input window, operand 3, single buffered']
    #allocation8 [shape = 's32[1]{0}', space=sflag, size = 0x4, scoped, tag = 'scoped memory for tpu_custom_call.1']
    #allocation9 [shape = 'u8[32768]{0}', space=vmem, size = 0x8000, scoped, tag = 'input window, operand 5, single buffered']
    #allocation10 [shape = 'u8[8192]{0}', space=vmem, size = 0x2000, scoped, tag = 'output window, operand 0']
    %12 = vsyncpa [#allocation5], 0
    %s13 = scalar_lea.sflag [#allocation5], 1
    %14 = vsyncpa %s13, 0
    %15 = vsyncpa [#allocation8], 0
    %16 = vsyncpa [#allocation6], 0
    %s17 = scalar_lea.sflag [#allocation6], 1
    %18 = vsyncpa %s17, 0
    loop: start=0, step=1, limit=4
    $region2: #{tpu_custom_call.1} parent=1 // loop_pre_header
      _
    $region3: #{tpu_custom_call.1} parent=1 // loop_header
      %s20 = sphi 0, %s24
      %p21 = scmp.ge.s32.totalorder %s20, 4
      %s27 = sphi 0, %s39
      %s28 = sphi 0, %s35
      %s29 = sphi 0, %s27
      %s30 = sphi 0, %s28
      %s31 = sphi 0, %s29
      %s32 = sphi 0, %s30
      %s42 = sphi 0, %s44
      %s45 = sphi 0, %s42
      %s46 = sphi 0, %s45
      %s62 = sphi 0, %s46
      %s66 = sphi 0, %s66
      %s68 = sphi 0, %s66
      %s69 = sphi 0, %s68
      %s83 = sphi 0, %s69
      %s87 = sphi 0, %s87
      %s89 = sphi 0, %s87
      %s90 = sphi 0, %s89
      %s104 = sphi 0, %s90
      %s110 = sphi 0, %s112
      %s113 = sphi 0, %s110
      %s114 = sphi 0, %s113
      %s130 = sphi 0, %s114
      %s136 = sphi 0, %s138
      %s139 = sphi 0, %s136
      %s140 = sphi 0, %s139
      %s156 = sphi 0, %s140
      %s162 = sphi 0, %s164
      %s165 = sphi 0, %s162
      %s166 = sphi 0, %s165
      %s182 = sphi 0, %s166
      %s186 = sphi 0, %s186
      %s188 = sphi 0, %s186
      %s189 = sphi 0, %s188
      %s203 = sphi 0, %s189
      %s209 = sphi 0, %s211
      %s212 = sphi 0, %s209
      %s213 = sphi 0, %s212
      %s229 = sphi 0, %s213
    $region4: #{tpu_custom_call.1} parent=1 // loop_header_branch
      %23 = sbr.rel (%p21) target = $region8
    $region5: #{tpu_custom_call.1} parent=1 // loop_body
      %s25 = ssub.s32 %s20, 1
      %s26 = ssub.s32 %s20, 2
      %s33 = sadd.s32 1, %s28
      %p34 = scmp.ge.s32.totalorder %s33, 1
      %s35 = scalar_select %p34, 0, %s33
      %s36 = sadd.s32 1, %s27
      %s37 = scalar_select %p34, %s36, %s27
      %p38 = scmp.ge.s32.totalorder %s37, 2
      %s39 = scalar_select %p38, 0, %s37
      %s40 = ssub.s32 %s27, %s39
      %p41 = scmp.eq.s32.totalorder %s40, 0
      %s43 = sadd.s32 %s42, 1
      %s44 = scalar_select %p41, %s42, %s43
      %p47 = pneg %p41
      %p48 = scmp.eq.s32.totalorder %s20, 1
      %p49 = por %p47, %p48
      %p50 = scmp.ne.s32.totalorder %s42, %s45
      %p51 = scmp.eq.s32.totalorder %s20, 0
      %p52 = por %p50, %p51
      %p53 = scmp.ne.s32.totalorder %s42, %s45
      %p54 = scmp.eq.s32.totalorder %s25, 1
      %p55 = por %p53, %p54
      %p56 = scmp.ne.s32.totalorder %s45, %s46
      %p57 = scmp.eq.s32.totalorder %s25, 0
      %p58 = por %p56, %p57
      %p59 = scmp.ne.s32.totalorder %s45, %s46
      %p60 = scmp.eq.s32.totalorder %s26, 1
      %p61 = por %p59, %p60
      %p63 = scmp.ne.s32.totalorder %s46, %s62
      %p64 = scmp.eq.s32.totalorder %s26, 0
      %p65 = por %p63, %p64
      %s67 = sadd.s32 %s66, 1
      %p70 = scmp.eq.s32.totalorder %s20, 1
      %p71 = scmp.ne.s32.totalorder %s66, %s68
      %p72 = scmp.eq.s32.totalorder %s20, 0
      %p73 = por %p71, %p72
      %p74 = scmp.ne.s32.totalorder %s66, %s68
      %p75 = scmp.eq.s32.totalorder %s25, 1
      %p76 = por %p74, %p75
      %p77 = scmp.ne.s32.totalorder %s68, %s69
      %p78 = scmp.eq.s32.totalorder %s25, 0
      %p79 = por %p77, %p78
      %p80 = scmp.ne.s32.totalorder %s68, %s69
      %p81 = scmp.eq.s32.totalorder %s26, 1
      %p82 = por %p80, %p81
      %p84 = scmp.ne.s32.totalorder %s69, %s83
      %p85 = scmp.eq.s32.totalorder %s26, 0
      %p86 = por %p84, %p85
      %s88 = sadd.s32 %s87, 1
      %p91 = scmp.eq.s32.totalorder %s20, 1
      %p92 = scmp.ne.s32.totalorder %s87, %s89
      %p93 = scmp.eq.s32.totalorder %s20, 0
      %p94 = por %p92, %p93
      %p95 = scmp.ne.s32.totalorder %s87, %s89
      %p96 = scmp.eq.s32.totalorder %s25, 1
      %p97 = por %p95, %p96
      %p98 = scmp.ne.s32.totalorder %s89, %s90
      %p99 = scmp.eq.s32.totalorder %s25, 0
      %p100 = por %p98, %p99
      %p101 = scmp.ne.s32.totalorder %s89, %s90
      %p102 = scmp.eq.s32.totalorder %s26, 1
      %p103 = por %p101, %p102
      %p105 = scmp.ne.s32.totalorder %s90, %s104
      %p106 = scmp.eq.s32.totalorder %s26, 0
      %p107 = por %p105, %p106
      %s108 = ssub.s32 %s28, %s35
      %p109 = scmp.eq.s32.totalorder %s108, 0
      %s111 = sadd.s32 %s110, 1
      %s112 = scalar_select %p109, %s110, %s111
      %p115 = pneg %p109
      %p116 = scmp.eq.s32.totalorder %s20, 1
      %p117 = por %p115, %p116
      %p118 = scmp.ne.s32.totalorder %s110, %s113
      %p119 = scmp.eq.s32.totalorder %s20, 0
      %p120 = por %p118, %p119
      %p121 = scmp.ne.s32.totalorder %s110, %s113
      %p122 = scmp.eq.s32.totalorder %s25, 1
      %p123 = por %p121, %p122
      %p124 = scmp.ne.s32.totalorder %s113, %s114
      %p125 = scmp.eq.s32.totalorder %s25, 0
      %p126 = por %p124, %p125
      %p127 = scmp.ne.s32.totalorder %s113, %s114
      %p128 = scmp.eq.s32.totalorder %s26, 1
      %p129 = por %p127, %p128
      %p131 = scmp.ne.s32.totalorder %s114, %s130
      %p132 = scmp.eq.s32.totalorder %s26, 0
      %p133 = por %p131, %p132
      %s134 = ssub.s32 %s28, %s35
      %p135 = scmp.eq.s32.totalorder %s134, 0
      %s137 = sadd.s32 %s136, 1
      %s138 = scalar_select %p135, %s136, %s137
      %p141 = pneg %p135
      %p142 = scmp.eq.s32.totalorder %s20, 1
      %p143 = por %p141, %p142
      %p144 = scmp.ne.s32.totalorder %s136, %s139
      %p145 = scmp.eq.s32.totalorder %s20, 0
      %p146 = por %p144, %p145
      %p147 = scmp.ne.s32.totalorder %s136, %s139
      %p148 = scmp.eq.s32.totalorder %s25, 1
      %p149 = por %p147, %p148
      %p150 = scmp.ne.s32.totalorder %s139, %s140
      %p151 = scmp.eq.s32.totalorder %s25, 0
      %p152 = por %p150, %p151
      %p153 = scmp.ne.s32.totalorder %s139, %s140
      %p154 = scmp.eq.s32.totalorder %s26, 1
      %p155 = por %p153, %p154
      %p157 = scmp.ne.s32.totalorder %s140, %s156
      %p158 = scmp.eq.s32.totalorder %s26, 0
      %p159 = por %p157, %p158
      %s160 = ssub.s32 %s28, %s35
      %p161 = scmp.eq.s32.totalorder %s160, 0
      %s163 = sadd.s32 %s162, 1
      %s164 = scalar_select %p161, %s162, %s163
      %p167 = pneg %p161
      %p168 = scmp.eq.s32.totalorder %s20, 1
      %p169 = por %p167, %p168
      %p170 = scmp.ne.s32.totalorder %s162, %s165
      %p171 = scmp.eq.s32.totalorder %s20, 0
      %p172 = por %p170, %p171
      %p173 = scmp.ne.s32.totalorder %s162, %s165
      %p174 = scmp.eq.s32.totalorder %s25, 1
      %p175 = por %p173, %p174
      %p176 = scmp.ne.s32.totalorder %s165, %s166
      %p177 = scmp.eq.s32.totalorder %s25, 0
      %p178 = por %p176, %p177
      %p179 = scmp.ne.s32.totalorder %s165, %s166
      %p180 = scmp.eq.s32.totalorder %s26, 1
      %p181 = por %p179, %p180
      %p183 = scmp.ne.s32.totalorder %s166, %s182
      %p184 = scmp.eq.s32.totalorder %s26, 0
      %p185 = por %p183, %p184
      %s187 = sadd.s32 %s186, 1
      %p190 = scmp.eq.s32.totalorder %s20, 1
      %p191 = scmp.ne.s32.totalorder %s186, %s188
      %p192 = scmp.eq.s32.totalorder %s20, 0
      %p193 = por %p191, %p192
      %p194 = scmp.ne.s32.totalorder %s186, %s188
      %p195 = scmp.eq.s32.totalorder %s25, 1
      %p196 = por %p194, %p195
      %p197 = scmp.ne.s32.totalorder %s188, %s189
      %p198 = scmp.eq.s32.totalorder %s25, 0
      %p199 = por %p197, %p198
      %p200 = scmp.ne.s32.totalorder %s188, %s189
      %p201 = scmp.eq.s32.totalorder %s26, 1
      %p202 = por %p200, %p201
      %p204 = scmp.ne.s32.totalorder %s189, %s203
      %p205 = scmp.eq.s32.totalorder %s26, 0
      %p206 = por %p204, %p205
      %s207 = ssub.s32 %s27, %s39
      %p208 = scmp.eq.s32.totalorder %s207, 0
      %s210 = sadd.s32 %s209, 1
      %s211 = scalar_select %p208, %s209, %s210
      %p214 = pneg %p208
      %p215 = scmp.eq.s32.totalorder %s20, 1
      %p216 = por %p214, %p215
      %p217 = scmp.ne.s32.totalorder %s209, %s212
      %p218 = scmp.eq.s32.totalorder %s20, 0
      %p219 = por %p217, %p218
      %p220 = scmp.ne.s32.totalorder %s209, %s212
      %p221 = scmp.eq.s32.totalorder %s25, 1
      %p222 = por %p220, %p221
      %p223 = scmp.ne.s32.totalorder %s212, %s213
      %p224 = scmp.eq.s32.totalorder %s25, 0
      %p225 = por %p223, %p224
      %p226 = scmp.ne.s32.totalorder %s212, %s213
      %p227 = scmp.eq.s32.totalorder %s26, 1
      %p228 = por %p226, %p227
      %p230 = scmp.ne.s32.totalorder %s213, %s229
      %p231 = scmp.eq.s32.totalorder %s26, 0
      %p232 = por %p230, %p231
      %p233 = scmp.le.s32.totalorder 1, %s20
      %p234 = scmp.lt.s32.totalorder %s20, 3
      %p235 = pnand %p233, %p234
      %p236 = pneg %p235
      // Predicated region
      $region9: #{tpu_custom_call.1} parent=5 // pred_check
        _
      $region10: #{tpu_custom_call.1} parent=5 // pred_check_branch
        %238 = sbr.rel (%p235) target = $region12
      $region11: #{tpu_custom_call.1} parent=5 // pred_region
        %s239 = ssub.s32 %s20, 1
        // Predicated region
        $region13: #{tpu_custom_call.1} parent=11 // pred_check
          %p240 = pneg %p79
        $region14: #{tpu_custom_call.1} parent=11 // pred_check_branch
          %242 = sbr.rel (%p240) target = $region16
        $region15: #{tpu_custom_call.1} parent=11 // pred_region
          _
        $region16: #{tpu_custom_call.1} parent=11 // pred_fallthru
          _
        // Predicated region
        $region17: #{tpu_custom_call.1} parent=11 // pred_check
          %p243 = pneg %p100
        $region18: #{tpu_custom_call.1} parent=11 // pred_check_branch
          %245 = sbr.rel (%p243) target = $region20
        $region19: #{tpu_custom_call.1} parent=11 // pred_region
          _
        $region20: #{tpu_custom_call.1} parent=11 // pred_fallthru
          _
        // Predicated region
        $region21: #{tpu_custom_call.1} parent=11 // pred_check
          %p246 = pneg %p126
        $region22: #{tpu_custom_call.1} parent=11 // pred_check_branch
          %248 = sbr.rel (%p246) target = $region24
        $region23: #{tpu_custom_call.1} parent=11 // pred_region
          %s250 = ssub.s32 1024, 1024
          %251 = vsyncadd [#allocation8], %s250
          %s252 = smul.addr %s30, 64
          %s253 = scalar_lea.hbm %s3, %s252
          %s254 = sshll.u32 [#allocation7], 4
          %s255 = int_to_ptr.vmem [resolvable:$true] %s254
          %260 = dma.hbm_to_vmem [thread:$0]  %s253, 1024, %s255, [#allocation8], 64, 64, 4
        $region24: #{tpu_custom_call.1} parent=11 // pred_fallthru
          _
        // Predicated region
        $region25: #{tpu_custom_call.1} parent=11 // pred_check
          %p261 = pneg %p152
        $region26: #{tpu_custom_call.1} parent=11 // pred_check_branch
          %263 = sbr.rel (%p261) target = $region28
        $region27: #{tpu_custom_call.1} parent=11 // pred_region
          %p264 = scmp.lt.s32.totalorder %s30, 0
          %s265 = scalar_select %p264, %s30, 0
          %s266 = scalar_lea.vmem %s4, %s265
        $region28: #{tpu_custom_call.1} parent=11 // pred_fallthru
          _
        // Predicated region
        $region29: #{tpu_custom_call.1} parent=11 // pred_check
          %p267 = pneg %p178
        $region30: #{tpu_custom_call.1} parent=11 // pred_check_branch
          %269 = sbr.rel (%p267) target = $region32
        $region31: #{tpu_custom_call.1} parent=11 // pred_region
          %s270 = smul.u32 16, %s30
          %s272 = ssub.s32 1024, 1024
          %273 = vsyncadd [#allocation8], %s272
          %s274 = smul.addr %s270, 64
          %s275 = scalar_lea.hbm %s5, %s274
          %s276 = sshll.u32 [#allocation9], 4
          %s277 = int_to_ptr.vmem [resolvable:$true] %s276
          %282 = dma.hbm_to_vmem [thread:$0]  %s275, 1024, %s277, [#allocation8], 64, 64, 4
        $region32: #{tpu_custom_call.1} parent=11 // pred_fallthru
          _
        // Predicated region
        $region33: #{tpu_custom_call.1} parent=11 // pred_check
          %p283 = pneg %p199
        $region34: #{tpu_custom_call.1} parent=11 // pred_check_branch
          %285 = sbr.rel (%p283) target = $region36
        $region35: #{tpu_custom_call.1} parent=11 // pred_region
          _
        $region36: #{tpu_custom_call.1} parent=11 // pred_fallthru
          _
      $region12: #{tpu_custom_call.1} parent=5 // pred_fallthru
        _
      %p286 = scmp.lt.s32.totalorder %s20, 2
      // Predicated region
      $region37: #{tpu_custom_call.1} parent=5 // pred_check
        %p287 = pneg %p286
      $region38: #{tpu_custom_call.1} parent=5 // pred_check_branch
        %289 = sbr.rel (%p287) target = $region40
      $region39: #{tpu_custom_call.1} parent=5 // pred_region
        // Predicated region
        $region41: #{tpu_custom_call.1} parent=39 // pred_check
          %p290 = pneg %p52
        $region42: #{tpu_custom_call.1} parent=39 // pred_check_branch
          %292 = sbr.rel (%p290) target = $region44
        $region43: #{tpu_custom_call.1} parent=39 // pred_region
          %s293 = sand.u32 %s42, 1
          %s294 = scalar_lea.sflag [#allocation5], %s293
          %s295 = sand.u32 %s42, 1
          %s296 = smul.addr %s295, 8
          %s297 = scalar_lea.vmem [#allocation4], %s296
          %s299 = ssub.s32 128, 128
          %300 = vsyncadd %s294, %s299
          %s301 = smul.addr %s27, 128
          %s302 = scalar_lea.hbm %s0, %s301
          %s304 = sshll.u32 %s297, 4
          %s305 = int_to_ptr.vmem [resolvable:$true] %s304
          %307 = dma.hbm_to_vmem [thread:$0]  %s302, 128, %s305, %s294
        $region44: #{tpu_custom_call.1} parent=39 // pred_fallthru
          _
      $region40: #{tpu_custom_call.1} parent=5 // pred_fallthru
        _
      %p308 = scmp.le.s32.totalorder 1, %s20
      %p309 = scmp.lt.s32.totalorder %s20, 3
      %p310 = pnand %p308, %p309
      %p311 = pneg %p310
      // Predicated region
      $region45: #{tpu_custom_call.1} parent=5 // pred_check
        _
      $region46: #{tpu_custom_call.1} parent=5 // pred_check_branch
        %313 = sbr.rel (%p310) target = $region48
      $region47: #{tpu_custom_call.1} parent=5 // pred_region
        %s314 = ssub.s32 %s20, 1
        %s315 = sand.u32 %s45, 1
        %s316 = scalar_lea.sflag [#allocation5], %s315
        %s317 = sand.u32 %s45, 1
        %s318 = smul.addr %s317, 8
        %s319 = scalar_lea.vmem [#allocation4], %s318
        // Predicated region
        $region49: #{tpu_custom_call.1} parent=47 // pred_check
          %p320 = pneg %p58
        $region50: #{tpu_custom_call.1} parent=47 // pred_check_branch
          %322 = sbr.rel (%p320) target = $region52
        $region51: #{tpu_custom_call.1} parent=47 // pred_region
          %323 = dma.done %s316, 128
        $region52: #{tpu_custom_call.1} parent=47 // pred_fallthru
          _
        // Predicated region
        $region53: #{tpu_custom_call.1} parent=47 // pred_check
          %p324 = pneg %p126
        $region54: #{tpu_custom_call.1} parent=47 // pred_check_branch
          %326 = sbr.rel (%p324) target = $region56
        $region55: #{tpu_custom_call.1} parent=47 // pred_region
          %327 = dma.done [#allocation8], 1024
        $region56: #{tpu_custom_call.1} parent=47 // pred_fallthru
          _
        // Predicated region
        $region57: #{tpu_custom_call.1} parent=47 // pred_check
          %p328 = pneg %p178
        $region58: #{tpu_custom_call.1} parent=47 // pred_check_branch
          %330 = sbr.rel (%p328) target = $region60
        $region59: #{tpu_custom_call.1} parent=47 // pred_region
          %331 = dma.done [#allocation8], 1024
        $region60: #{tpu_custom_call.1} parent=47 // pred_fallthru
          _
        %s332 = sand.u32 %s45, 1
        %s333 = scalar_lea.sflag [#allocation5], %s332
        %s334 = sand.u32 %s45, 1
        %s335 = smul.addr %s334, 8
        %s336 = scalar_lea.vmem [#allocation4], %s335
        %p337 = pneg %p58
        %p338 = pneg %p55
        %p339 = pneg %p79
        %p340 = pneg %p76
        %p341 = pneg %p100
        %p342 = pneg %p97
        %p343 = pneg %p126
        %p344 = pneg %p123
        %p345 = scmp.lt.s32.totalorder %s30, 0
        %s346 = scalar_select %p345, %s30, 0
        %s347 = scalar_lea.vmem %s4, %s346
        %p348 = pneg %p152
        %p349 = pneg %p149
        %p350 = pneg %p178
        %p351 = pneg %p175
        %p352 = pneg %p199
        %p353 = pneg %p196
        %p354 = pneg %p225
        %p355 = pneg %p222
        %s356 = sand.u32 %s212, 1
        %s357 = scalar_lea.sflag [#allocation6], %s356
        %s358 = sand.u32 %s212, 1
        %s359 = smul.addr %s358, 8
        %s360 = scalar_lea.vmem [#allocation10], %s359
        %p361 = scmp.lt.s32.totalorder %s30, 0
        %s362 = scalar_select %p361, %s30, 0
        %s363 = scalar_lea.vmem %s4, %s362
        %s364 = smul.u32 16, %s30
        %p366 = scmp.eq.s32.totalorder %s30, 0
        // Predicated region
        $region61: #{tpu_custom_call.1} parent=47 // pred_check
          %p367 = pneg %p366
        $region62: #{tpu_custom_call.1} parent=47 // pred_check_branch
          %369 = sbr.rel (%p367) target = $region64
        $region63: #{tpu_custom_call.1} parent=47 // pred_region
          %v370 = vld [vmem:[%s319] sm:$0xff]
          %371 = vadd.xlane.f32.xlu0 %v370
          %v372 = vpop.xlane.xlu0 %371
          %v373 = vmul.f32 %v372, 0.03125
          %v374 = vmul.f32 %v370, %v370
          %375 = vadd.xlane.f32.xlu0 %v374
          %v376 = vpop.xlane.xlu0 %375
          %v377 = vmul.f32 %v376, 0.03125
          %v378 = vmul.f32 %v373, %v373
          %v379 = vsub.f32 %v377, %v378
          %v380 = vmax.f32 %v379, 0.0
          %v381 = vsub.f32 %v370, %v373
          %v382 = vadd.f32 %v380, 1e-05
          %v383 = vrsqrt.pop %v382
          %v384 = vmul.f32 %v381, %v383
          %v385 = vld [vmem:[%s1] sm:$0x1]
          %v387 = vlaneseq
          %v388 = vshrl.u32 %v387, 7
          %v389 = vsub.s32 0, %v388
          %v390 = vrot.slane %v385, %v389
          %v392 = vmul.f32 %v384, %v390
          %v393 = vld [vmem:[%s2] sm:$0x1]
          %v395 = vlaneseq
          %v396 = vshrl.u32 %v395, 7
          %v397 = vsub.s32 0, %v396
          %v398 = vrot.slane %v393, %v397
          %v400 = vadd.f32 %v392, %v398
          %v401 = vpack.c.bf16 %v400, %v400
          %402 = vst [vmem:[#allocation2] sm:$0xf] %v401
          %403 = vst [vmem:[#allocation3] sm:$0xff] 0.0
        $region64: #{tpu_custom_call.1} parent=47 // pred_fallthru
          _
        %v404 = vld [vmem:[#allocation2] sm:$0xf]
        %v405 = vld [vmem:[#allocation7] sm:$0xf]
        %v406 = vld [vmem:[#allocation7 + $0x4] sm:$0xf]
        %v407 = vld [vmem:[#allocation7 + $0x8] sm:$0xf]
        %v408 = vld [vmem:[#allocation7 + $0xc] sm:$0xf]
        %v409 = vld [vmem:[#allocation7 + $0x10] sm:$0xf]
        %v410 = vld [vmem:[#allocation7 + $0x14] sm:$0xf]
        %v411 = vld [vmem:[#allocation7 + $0x18] sm:$0xf]
        %v412 = vld [vmem:[#allocation7 + $0x1c] sm:$0xf]
        %v413 = vld [vmem:[#allocation7 + $0x20] sm:$0xf]
        %v414 = vld [vmem:[#allocation7 + $0x24] sm:$0xf]
        %v415 = vld [vmem:[#allocation7 + $0x28] sm:$0xf]
        %v416 = vld [vmem:[#allocation7 + $0x2c] sm:$0xf]
        %v417 = vld [vmem:[#allocation7 + $0x30] sm:$0xf]
        %v418 = vld [vmem:[#allocation7 + $0x34] sm:$0xf]
        %v419 = vld [vmem:[#allocation7 + $0x38] sm:$0xf]
        %v420 = vld [vmem:[#allocation7 + $0x3c] sm:$0xf]
        %v421 = vld [vmem:[%s363] sm:$0x1]
        %v423 = vlaneseq
        %v424 = vshrl.u32 %v423, 7
        %v425 = vsub.s32 0, %v424
        %v426 = vrot.slane %v421, %v425
        %v444 = vunpack.c.l.b16 %v405
        %v445 = vunpack.c.l.b16 %v406
        %v446 = vunpack.c.l.b16 %v407
        %v447 = vunpack.c.l.b16 %v408
        %v448 = vunpack.c.l.b16 %v409
        %v449 = vunpack.c.l.b16 %v410
        %v450 = vunpack.c.l.b16 %v411
        %v451 = vunpack.c.l.b16 %v412
        %v452 = vunpack.c.l.b16 %v413
        %v453 = vunpack.c.l.b16 %v414
        %v454 = vunpack.c.l.b16 %v415
        %v455 = vunpack.c.l.b16 %v416
        %v456 = vunpack.c.l.b16 %v417
        %v457 = vunpack.c.l.b16 %v418
        %v458 = vunpack.c.l.b16 %v419
        %v459 = vunpack.c.l.b16 %v420
        %v460 = vpack.c.b16 %v445, %v444
        %v461 = vpack.c.b16 %v447, %v446
        %v462 = vpack.c.b16 %v449, %v448
        %v463 = vpack.c.b16 %v451, %v450
        %v464 = vpack.c.b16 %v453, %v452
        %v465 = vpack.c.b16 %v455, %v454
        %v466 = vpack.c.b16 %v457, %v456
        %v467 = vpack.c.b16 %v459, %v458
        %476 = vmatprep.subr.bf16.mxu0 0
        %477 = vmatpush1.bf16.msra.mxu0 %v467
        %478 = vmatprep.subr.bf16.mxu0 0
        %479 = vmatpush1.bf16.msra.mxu0 %v466
        %480 = vmatprep.subr.bf16.mxu0 0
        %481 = vmatpush1.bf16.msra.mxu0 %v465
        %482 = vmatprep.subr.bf16.mxu0 0
        %483 = vmatpush1.bf16.msra.mxu0 %v464
        %484 = vmatprep.subr.bf16.mxu0 0
        %485 = vmatpush1.bf16.msra.mxu0 %v463
        %486 = vmatprep.subr.bf16.mxu0 0
        %487 = vmatpush1.bf16.msra.mxu0 %v462
        %488 = vmatprep.subr.bf16.mxu0 0
        %489 = vmatpush1.bf16.msra.mxu0 %v461
        %490 = vmatprep.subr.bf16.mxu0 0
        %491 = vmatpush1.bf16.msra.mxu0 %v460
        %492 = vmatprep.subr.bf16.mxu0 0
        %493 = vmatpush2.bf16.msra.mxu0 0
        %494 = vmatprep.subr.bf16.mxu0 0
        %495 = vmatpush2.bf16.msra.mxu0 0
        %496 = vmatprep.subr.bf16.mxu0 0
        %497 = vmatpush2.bf16.msra.mxu0 0
        %498 = vmatprep.subr.bf16.mxu0 0
        %499 = vmatpush2.bf16.msra.mxu0 0
        %500 = vmatprep.subr.bf16.mxu0 0
        %501 = vmatpush2.bf16.msra.mxu0 0
        %502 = vmatprep.subr.bf16.mxu0 0
        %503 = vmatpush2.bf16.msra.mxu0 0
        %504 = vmatprep.subr.bf16.mxu0 0
        %505 = vmatpush2.bf16.msra.mxu0 0
        %506 = vmatprep.subr.bf16.mxu0 0
        %507 = vmatpush2.bf16.msra.mxu0 0
        %508 = vmatprep.mubr.bf16.mxu0 0
        %509 = vmatmul.mubr.bf16.gmra.mxu0 %v404
        %v510 = vpop.f32.mrf.mxu0
        %v511 = vadd.f32 %v426, %v510
        %v512 = vpop.f32.mrf.mxu0
        %v513 = vpop.f32.mrf.mxu0
        %v514 = vpop.f32.mrf.mxu0
        %515 = vdwg.mxu0
        %v516 = vmul.f32 %v511, 0.5
        %v517 = vmul.f32 %v511, 0.70710677
        %v518 = verf.f32.pop %v517
        %v519 = vadd.f32 %v518, 1.0
        %v520 = vmul.f32 %v516, %v519
        %v521 = vld [vmem:[#allocation3] sm:$0xff]
        %v522 = vpack.c.bf16 %v520, %v520
        %v523 = vld [vmem:[#allocation9] sm:$0xf]
        %v524 = vld [vmem:[#allocation9 + $0x4] sm:$0xf]
        %v525 = vld [vmem:[#allocation9 + $0x8] sm:$0xf]
        %v526 = vld [vmem:[#allocation9 + $0xc] sm:$0xf]
        %v527 = vld [vmem:[#allocation9 + $0x10] sm:$0xf]
        %v528 = vld [vmem:[#allocation9 + $0x14] sm:$0xf]
        %v529 = vld [vmem:[#allocation9 + $0x18] sm:$0xf]
        %v530 = vld [vmem:[#allocation9 + $0x1c] sm:$0xf]
        %v531 = vld [vmem:[#allocation9 + $0x20] sm:$0xf]
        %v532 = vld [vmem:[#allocation9 + $0x24] sm:$0xf]
        %v533 = vld [vmem:[#allocation9 + $0x28] sm:$0xf]
        %v534 = vld [vmem:[#allocation9 + $0x2c] sm:$0xf]
        %v535 = vld [vmem:[#allocation9 + $0x30] sm:$0xf]
        %v536 = vld [vmem:[#allocation9 + $0x34] sm:$0xf]
        %v537 = vld [vmem:[#allocation9 + $0x38] sm:$0xf]
        %v538 = vld [vmem:[#allocation9 + $0x3c] sm:$0xf]
        %v555 = vunpack.c.l.b16 %v523
        %v556 = vunpack.c.l.b16 %v524
        %v557 = vunpack.c.l.b16 %v525
        %v558 = vunpack.c.l.b16 %v526
        %v559 = vunpack.c.l.b16 %v527
        %v560 = vunpack.c.l.b16 %v528
        %v561 = vunpack.c.l.b16 %v529
        %v562 = vunpack.c.l.b16 %v530
        %v563 = vunpack.c.l.b16 %v531
        %v564 = vunpack.c.l.b16 %v532
        %v565 = vunpack.c.l.b16 %v533
        %v566 = vunpack.c.l.b16 %v534
        %v567 = vunpack.c.l.b16 %v535
        %v568 = vunpack.c.l.b16 %v536
        %v569 = vunpack.c.l.b16 %v537
        %v570 = vunpack.c.l.b16 %v538
        %v571 = vpack.c.b16 %v556, %v555
        %v572 = vpack.c.b16 %v558, %v557
        %v573 = vpack.c.b16 %v560, %v559
        %v574 = vpack.c.b16 %v562, %v561
        %v575 = vpack.c.b16 %v564, %v563
        %v576 = vpack.c.b16 %v566, %v565
        %v577 = vpack.c.b16 %v568, %v567
        %v578 = vpack.c.b16 %v570, %v569
        %587 = vmatprep.subr.bf16.mxu0 0
        %588 = vmatpush1.bf16.msra.mxu0 %v578
        %589 = vmatprep.subr.bf16.mxu0 0
        %590 = vmatpush1.bf16.msra.mxu0 %v577
        %591 = vmatprep.subr.bf16.mxu0 0
        %592 = vmatpush1.bf16.msra.mxu0 %v576
        %593 = vmatprep.subr.bf16.mxu0 0
        %594 = vmatpush1.bf16.msra.mxu0 %v575
        %595 = vmatprep.subr.bf16.mxu0 0
        %596 = vmatpush1.bf16.msra.mxu0 %v574
        %597 = vmatprep.subr.bf16.mxu0 0
        %598 = vmatpush1.bf16.msra.mxu0 %v573
        %599 = vmatprep.subr.bf16.mxu0 0
        %600 = vmatpush1.bf16.msra.mxu0 %v572
        %601 = vmatprep.subr.bf16.mxu0 0
        %602 = vmatpush1.bf16.msra.mxu0 %v571
        %603 = vmatprep.subr.bf16.mxu0 0
        %604 = vmatpush2.bf16.msra.mxu0 0
        %605 = vmatprep.subr.bf16.mxu0 0
        %606 = vmatpush2.bf16.msra.mxu0 0
        %607 = vmatprep.subr.bf16.mxu0 0
        %608 = vmatpush2.bf16.msra.mxu0 0
        %609 = vmatprep.subr.bf16.mxu0 0
        %610 = vmatpush2.bf16.msra.mxu0 0
        %611 = vmatprep.subr.bf16.mxu0 0
        %612 = vmatpush2.bf16.msra.mxu0 0
        %613 = vmatprep.subr.bf16.mxu0 0
        %614 = vmatpush2.bf16.msra.mxu0 0
        %615 = vmatprep.subr.bf16.mxu0 0
        %616 = vmatpush2.bf16.msra.mxu0 0
        %617 = vmatprep.subr.bf16.mxu0 0
        %618 = vmatpush2.bf16.msra.mxu0 0
        %619 = vmatprep.mubr.bf16.mxu0 0
        %620 = vmatmul.mubr.bf16.gmra.mxu0 %v522
        %v621 = vpop.f32.mrf.mxu0
        %v622 = vadd.f32 0.0, %v621
        %v623 = vpop.f32.mrf.mxu0
        %v624 = vpop.f32.mrf.mxu0
        %v625 = vpop.f32.mrf.mxu0
        %626 = vdwg.mxu0
        %v627 = vadd.f32 %v521, %v622
        %628 = vst [vmem:[#allocation3] sm:$0xff] %v627
        // Predicated region
        $region65: #{tpu_custom_call.1} parent=47 // pred_check
          %p629 = pneg %p366
        $region66: #{tpu_custom_call.1} parent=47 // pred_check_branch
          %631 = sbr.rel (%p629) target = $region68
        $region67: #{tpu_custom_call.1} parent=47 // pred_region
          %v632 = vld [vmem:[#allocation3] sm:$0xff]
          %v633 = vld [vmem:[%s6] sm:$0x1]
          %v635 = vlaneseq
          %v636 = vshrl.u32 %v635, 7
          %v637 = vsub.s32 0, %v636
          %v638 = vrot.slane %v633, %v637
          %v640 = vadd.f32 %v632, %v638
          %641 = vst [vmem:[%s360] sm:$0xff] %v640
        $region68: #{tpu_custom_call.1} parent=47 // pred_fallthru
          _
        %s642 = sand.u32 %s212, 1
        %s643 = scalar_lea.sflag [#allocation6], %s642
        %s644 = sand.u32 %s212, 1
        %s645 = smul.addr %s644, 8
        %s646 = scalar_lea.vmem [#allocation10], %s645
        // Predicated region
        $region69: #{tpu_custom_call.1} parent=47 // pred_check
          %p647 = pneg %p222
        $region70: #{tpu_custom_call.1} parent=47 // pred_check_branch
          %649 = sbr.rel (%p647) target = $region72
        $region71: #{tpu_custom_call.1} parent=47 // pred_region
          %s651 = ssub.s32 128, 128
          %652 = vsyncadd %s643, %s651
          %s653 = smul.addr %s29, 128
          %s654 = scalar_lea.hbm %s7, %s653
          %s656 = sshll.u32 %s646, 4
          %s657 = int_to_ptr.vmem [resolvable:$true] %s656
          %659 = dma.vmem_to_hbm [thread:$0]  %s657, 128, %s654, %s643
        $region72: #{tpu_custom_call.1} parent=47 // pred_fallthru
          _
      $region48: #{tpu_custom_call.1} parent=5 // pred_fallthru
        _
      %p660 = scmp.le.s32.totalorder 2, %s20
      // Predicated region
      $region73: #{tpu_custom_call.1} parent=5 // pred_check
        %p661 = pneg %p660
      $region74: #{tpu_custom_call.1} parent=5 // pred_check_branch
        %663 = sbr.rel (%p661) target = $region76
      $region75: #{tpu_custom_call.1} parent=5 // pred_region
        %s664 = ssub.s32 %s20, 2
        // Predicated region
        $region77: #{tpu_custom_call.1} parent=75 // pred_check
          %p665 = pneg %p228
        $region78: #{tpu_custom_call.1} parent=75 // pred_check_branch
          %667 = sbr.rel (%p665) target = $region80
        $region79: #{tpu_custom_call.1} parent=75 // pred_region
          %s668 = sand.u32 %s213, 1
          %s669 = scalar_lea.sflag [#allocation6], %s668
          %s670 = sand.u32 %s213, 1
          %s671 = smul.addr %s670, 8
          %s672 = scalar_lea.vmem [#allocation10], %s671
          %673 = dma.done %s669, 128
        $region80: #{tpu_custom_call.1} parent=75 // pred_fallthru
          _
      $region76: #{tpu_custom_call.1} parent=5 // pred_fallthru
        _
    $region6: #{tpu_custom_call.1} parent=1 // loop_footer
      %s24 = sadd.s32 1, %s20
    $region7: #{tpu_custom_call.1} parent=1 // loop_footer_branch
      %19 = sbr.rel target = $region3
    $region8: #{tpu_custom_call.1} parent=1 // loop_exit
      _
    %674 = vsyncpa [#allocation5], 1
    %s675 = scalar_lea.sflag [#allocation5], 1
    %676 = vsyncpa %s675, 1
    %677 = vsyncpa [#allocation8], 1
    %678 = vsyncpa [#allocation6], 1
    %s679 = scalar_lea.sflag [#allocation6], 1
    %680 = vsyncpa %s679, 1

</llo_original>
